<compile_context>
chip_gen: v5e
topology: v5e:2x2
jax: 0.10.0
libtpu: 0.0.40
codegen_flags: <defaults>
</compile_context>

<pallas_src>
import math
import functools

import jax
import jax.numpy as jnp
from jax.experimental import pallas as pl
from jax.experimental.pallas import tpu as pltpu

BN_EPS = 1e-5
BN_SCALE = 1.0 / math.sqrt(1.0 + BN_EPS)


def _round_up(x, m):
    return (x + m - 1) // m * m


# ---------------------------------------------------------------------------
# Pallas kernel: fused (patches @ combined-weights) * scale + shift [+ ReLU]
# ---------------------------------------------------------------------------
def _fused_conv_mm_kernel(x_ref, w_ref, scale_ref, shift_ref, o_ref, *, relu):
    # bf16 operands on the MXU, f32 accumulation, f32 epilogue.
    acc = jnp.dot(x_ref[...], w_ref[...], preferred_element_type=jnp.float32)
    y = acc * scale_ref[...] + shift_ref[...]
    if relu:
        y = jnp.maximum(y, 0.0)
    o_ref[...] = y.astype(o_ref.dtype)


def _pick_tile_m(M, target=512):
    """Largest M-tile (<= target) that divides M; pad only as a last resort."""
    if M % target == 0:
        return target, M
    for t in (256, 128, 64, 32, 16):
        if M % t == 0:
            return t, M
    t = 256 if M > 256 else _round_up(M, 16)
    return t, _round_up(M, t)


def fused_conv_matmul(patches, w, scale, shift, relu=True, tn=128):
    """act((patches @ w) * scale + shift).

    patches: [M, K] bf16   (im2col rows, one per low-res output pixel)
    w:       [K, N] bf16   (combined position-conv weights)
    scale:   [1, N] f32    (folded BN scale)
    shift:   [1, N] f32    (folded conv bias + BN shift)
    """
    M, K = patches.shape
    K2, N = w.shape
    assert K == K2
    tm, Mp = _pick_tile_m(M)
    Np = _round_up(N, tn)
    x = patches if Mp == M else jnp.pad(patches, ((0, Mp - M), (0, 0)))
    if Np != N:
        w = jnp.pad(w, ((0, 0), (0, Np - N)))
        scale = jnp.pad(scale, ((0, 0), (0, Np - N)))
        shift = jnp.pad(shift, ((0, 0), (0, Np - N)))

    grid = (Mp // tm, Np // tn)   # both axes "parallel": >=2 tiles feeds both v7x TCs
    out = pl.pallas_call(
        functools.partial(_fused_conv_mm_kernel, relu=relu),
        out_shape=jax.ShapeDtypeStruct((Mp, Np), jnp.float32),
        grid_spec=pltpu.PrefetchScalarGridSpec(
            num_scalar_prefetch=0,
            grid=grid,
            in_specs=[
                pl.BlockSpec((tm, K), lambda i, j: (i, 0)),   # K(=36) in one block
                pl.BlockSpec((K, tn), lambda i, j: (0, j)),
                pl.BlockSpec((1, tn), lambda i, j: (0, j)),
                pl.BlockSpec((1, tn), lambda i, j: (0, j)),
            ],
            out_specs=pl.BlockSpec((tm, tn), lambda i, j: (i, j)),
        ),
        compiler_params=pltpu.CompilerParams(
            dimension_semantics=("parallel", "parallel")),
    )(x, w, scale, shift)
    if Mp != M or Np != N:
        out = out[:M, :N]
    return out


# ---------------------------------------------------------------------------
# Wrapper-side glue: im2col over the shared 6x6 window, weight re-layout
# ---------------------------------------------------------------------------
def _im2col_combined(xp, window, stride):
    """xp: [B, Hp, Wp] padded single-channel input -> [B*Ho*Wo, window*window]."""
    B, Hp, Wp = xp.shape
    Ho = (Hp - window) // stride + 1
    Wo = (Wp - window) // stride + 1
    cols = []
    for dy in range(window):
        for dx in range(window):
            cols.append(xp[:, dy:dy + stride * (Ho - 1) + 1:stride,
                              dx:dx + stride * (Wo - 1) + 1:stride])
    p = jnp.stack(cols, axis=-1)                       # [B, Ho, Wo, window^2]
    return p.reshape(B * Ho * Wo, window * window), Ho, Wo


def prepare_position_conv(weights, biases, pattern_size=2, kernel_size=5):
    """One-time re-layout of the ps*ps sub-conv weights into a single [K, N]
    bf16 matrix (K = (k+ps-1)^2, N = ps*ps*bc) and folded scale/shift.
    Column order: n = (i*ps + j)*bc + c."""
    ps, k = pattern_size, kernel_size
    bc = weights[0].shape[0]
    assert weights[0].shape[1] == 1, "position_conv uses a single input channel"
    window = k + ps - 1
    N = ps * ps * bc
    w = jnp.zeros((window, window, ps * ps, bc), jnp.float32)
    for i in range(ps):
        for j in range(ps):
            p = i * ps + j
            wij = jnp.transpose(weights[p][:, 0, :, :], (1, 2, 0))   # [k, k, bc]
            w = w.at[i:i + k, j:j + k, p, :].set(wij)
    w_combined = w.reshape(window * window, N).astype(jnp.bfloat16)
    scale = jnp.full((1, N), BN_SCALE, jnp.float32)
    shift = (BN_SCALE * jnp.concatenate(biases)).reshape(1, N).astype(jnp.float32)
    return w_combined, scale, shift


def position_conv_forward(x, w_combined, scale, shift,
                          pattern_size=2, kernel_size=5):
    """x: [B, 1, H, W] f32  ->  [B, bc, H, W] f32 (pa_conv2d + BN + ReLU)."""
    B, C, H, W = x.shape
    ps, k = pattern_size, kernel_size
    assert C == 1 and H % ps == 0 and W % ps == 0
    pad = k // 2
    window = k + ps - 1
    N = w_combined.shape[1]
    bc = N // (ps * ps)

    # ReplicationPad2d(k//2), then cast to bf16 for the MXU operands.
    xp = jnp.pad(x[:, 0], ((0, 0), (pad, pad), (pad, pad)), mode='edge')
    xp = xp.astype(jnp.bfloat16)

    # All ps*ps shifted 5x5/stride-ps sub-convs read the same 6x6 window:
    # a single im2col + one fused matmul covers all of them.
    patches, Ho, Wo = _im2col_combined(xp, window, ps)
    y = fused_conv_matmul(patches, w_combined, scale, shift, relu=True)

    # pixel-shuffle: out[b, c, ps*a + i, ps*b + j] = y[(b,a,b), (i*ps+j)*bc + c]
    y = y.reshape(B, Ho, Wo, ps, ps, bc)
    y = y.transpose(0, 5, 1, 3, 2, 4).reshape(B, bc, Ho * ps, Wo * ps)
    return y


# ---------------------------------------------------------------------------
# Pure-JAX f32 reference (direct transcription of the PyTorch forward)
# ---------------------------------------------------------------------------
def reference_position_conv(x, weights, biases, pattern_size=2, kernel_size=5):
    B, C, H, W = x.shape
    ps, k = pattern_size, kernel_size
    pad = k // 2
    xp = jnp.pad(x, ((0, 0), (0, 0), (pad, pad), (pad, pad)), mode='edge')
    hp, wp = xp.shape[2], xp.shape[3]
    outs = []
    for i in range(ps):
        for j in range(ps):
            sl = xp[:, :, i:hp - ps + i + 1, j:wp - ps + j + 1]
            o = jax.lax.conv_general_dilated(
                sl, weights[i * ps + j], window_strides=(ps, ps),
                padding='VALID', dimension_numbers=('NCHW', 'OIHW', 'NCHW'),
                precision=jax.lax.Precision.HIGHEST)
            outs.append(o + biases[i * ps + j][None, :, None, None])
    bc = weights[0].shape[0]
    Ho, Wo = outs[0].shape[2], outs[0].shape[3]
    st = jnp.stack(outs, axis=2).reshape(B, bc, ps, ps, Ho, Wo)
    out = st.transpose(0, 1, 4, 2, 5, 3).reshape(B, bc, Ho * ps, Wo * ps)
    out = out * BN_SCALE          # BatchNorm, inference-mode defaults
    return jnp.maximum(out, 0.0)


# ---------------------------------------------------------------------------
# Parameter init (mirrors truncated_normal_ init; biases zero-initialized)
# ---------------------------------------------------------------------------
def trunc_normal(key, shape, fan):
    std = math.sqrt(1.3 * 2.0 / fan)
    return std * jax.random.truncated_normal(key, -2.0, 2.0, shape, jnp.float32)


def init_position_conv_params(key, bc=64, pattern_size=2, kernel_size=5):
    nps = pattern_size * pattern_size
    keys = jax.random.split(key, nps)
    fan = kernel_size * kernel_size * 1
    weights = [trunc_normal(keys[p], (bc, 1, kernel_size, kernel_size), fan)
               for p in range(nps)]
    biases = [jnp.zeros((bc,), jnp.float32) for _ in range(nps)]
    return weights, biases


if __name__ == "__main__":
    key = jax.random.PRNGKey(0)
    k_img, k_par = jax.random.split(key)

    B, H, W = 2, 16, 16
    bc, pattern_size, kernel_size = 64, 2, 5

    x = jax.random.uniform(k_img, (B, 1, H, W), jnp.float32)
    weights, biases = init_position_conv_params(k_par, bc, pattern_size, kernel_size)

    # One-time weight re-layout / bf16 cast / BN-bias folding (outside hot path).
    w_combined, scale, shift = prepare_position_conv(
        weights, biases, pattern_size, kernel_size)

    fwd = jax.jit(position_conv_forward)
    out = jax.block_until_ready(fwd(x, w_combined, scale, shift))
    assert out.shape == (B, bc, H, W), out.shape

    # Sanity check against the pure-JAX f32 reference (bf16 operands -> loose tol).
    ref = jax.block_until_ready(
        reference_position_conv(x, weights, biases, pattern_size, kernel_size))
    err = float(jnp.max(jnp.abs(out - ref)))
    assert err < 5e-2, f"max abs error vs reference: {err}"
    print("KERNEL_OK")
</pallas_src>

<mosaic_0001>
module attributes {stable_mosaic.version = 11 : i64} {
  func.func @_fused_conv_mm_kernel(%arg0: i32, %arg1: i32, %arg2: memref<128x36xbf16, #tpu.memory_space<vmem>>, %arg3: memref<36x128xbf16, #tpu.memory_space<vmem>>, %arg4: memref<1x128xf32, #tpu.memory_space<vmem>>, %arg5: memref<1x128xf32, #tpu.memory_space<vmem>>, %arg6: memref<128x128xf32, #tpu.memory_space<vmem>>) attributes {dimension_semantics = [#tpu.dimension_semantics<parallel>, #tpu.dimension_semantics<parallel>], iteration_bounds = array<i64: 1, 2>, scalar_prefetch = 0 : i64, scratch_operands = 0 : i64, tpu.core_type = #tpu.core_type<tc>, window_params = [{transform_indices = @transform_0, window_bounds = array<i64: 128, 36>}, {transform_indices = @transform_1, window_bounds = array<i64: 36, 128>}, {transform_indices = @transform_2, window_bounds = array<i64: 1, 128>}, {transform_indices = @transform_3, window_bounds = array<i64: 1, 128>}, {transform_indices = @transform_4, window_bounds = array<i64: 128, 128>}]} {
    %c0 = arith.constant 0 : index
    %c0_0 = arith.constant 0 : index
    %0 = vector.load %arg2[%c0, %c0_0] : memref<128x36xbf16, #tpu.memory_space<vmem>>, vector<128x36xbf16>
    %c0_1 = arith.constant 0 : index
    %c0_2 = arith.constant 0 : index
    %1 = vector.load %arg3[%c0_1, %c0_2] : memref<36x128xbf16, #tpu.memory_space<vmem>>, vector<36x128xbf16>
    %cst = arith.constant dense<0.000000e+00> : vector<128x128xf32>
    %2 = tpu.matmul %0, %1, %cst {dimension_numbers = #tpu.dot_dimension_numbers<[1], [0], [0], [1], [0, 0, 1, 1], [], []>} : vector<128x36xbf16>, vector<36x128xbf16>, vector<128x128xf32> -> vector<128x128xf32>
    %c0_3 = arith.constant 0 : index
    %c0_4 = arith.constant 0 : index
    %3 = vector.load %arg4[%c0_3, %c0_4] : memref<1x128xf32, #tpu.memory_space<vmem>>, vector<1x128xf32>
    %4 = vector.broadcast %3 : vector<1x128xf32> to vector<128x128xf32>
    %5 = arith.mulf %2, %4 : vector<128x128xf32>
    %c0_5 = arith.constant 0 : index
    %c0_6 = arith.constant 0 : index
    %6 = vector.load %arg5[%c0_5, %c0_6] : memref<1x128xf32, #tpu.memory_space<vmem>>, vector<1x128xf32>
    %7 = vector.broadcast %6 : vector<1x128xf32> to vector<128x128xf32>
    %8 = arith.addf %5, %7 : vector<128x128xf32>
    %cst_7 = arith.constant 0.000000e+00 : f32
    %9 = vector.broadcast %cst_7 : f32 to vector<128x128xf32>
    %10 = arith.maximumf %8, %9 : vector<128x128xf32>
    %c0_8 = arith.constant 0 : index
    %c0_9 = arith.constant 0 : index
    %11 = vector.load %arg6[%c0_8, %c0_9] : memref<128x128xf32, #tpu.memory_space<vmem>>, vector<128x128xf32>
    tpu.vector_store %arg6[%c0_8, %c0_9], %10 {strides = array<i32>} : memref<128x128xf32, #tpu.memory_space<vmem>>, vector<128x128xf32>,
    return
  }
  func.func @transform_0(%arg0: i32, %arg1: i32) -> (i32, i32) {
    %c0_i32 = arith.constant 0 : i32
    %c0_i32_0 = arith.constant 0 : i32
    return %arg0, %c0_i32 : i32, i32
  }
  func.func @transform_1(%arg0: i32, %arg1: i32) -> (i32, i32) {
    %c0_i32 = arith.constant 0 : i32
    %c0_i32_0 = arith.constant 0 : i32
    return %c0_i32, %arg1 : i32, i32
  }
  func.func @transform_2(%arg0: i32, %arg1: i32) -> (i32, i32) {
    %c0_i32 = arith.constant 0 : i32
    %c0_i32_0 = arith.constant 0 : i32
    return %c0_i32, %arg1 : i32, i32
  }
  func.func @transform_3(%arg0: i32, %arg1: i32) -> (i32, i32) {
    %c0_i32 = arith.constant 0 : i32
    %c0_i32_0 = arith.constant 0 : i32
    return %c0_i32, %arg1 : i32, i32
  }
  func.func @transform_4(%arg0: i32, %arg1: i32) -> (i32, i32) {
    %c0_i32 = arith.constant 0 : i32
    return %arg0, %arg1 : i32, i32
  }
}

</mosaic_0001>

<llo_original>
// kernel: position_conv_forward.1
$region0: #{position_conv_forward.1}
  #allocation0 [shape = 'u32[]', space=smem, size = 0x4, offset = 0x4, fixed_abs, tag = 'smem constant byte address 0x4 - core index']
  #allocation1 [shape = 'u32[72,128]{1,0:T(1,128)}', space=vmem, size = 0x9000, scoped, tag = 'internal scratch']
  %s0 = inlined_call_operand.vmem [shape: bf16[128,36], index: 0, kind: input, shape index: {}]
  %s1 = inlined_call_operand.vmem [shape: bf16[36,256], index: 1, kind: input, shape index: {}]
  %s2 = inlined_call_operand.vmem [shape: f32[1,256], index: 2, kind: input, shape index: {}]
  %s3 = inlined_call_operand.vmem [shape: f32[1,256], index: 3, kind: input, shape index: {}]
  %s4 = inlined_call_operand.vmem [shape: f32[128,256], index: 4, kind: output, shape index: {}]
  %s5 = sld [smem:[#allocation0]]
  $region124: #{position_conv_forward.1} parent=0
    _
  %s7 = ssub.s32 1, %s5
  %s8 = scalar_select 0, %s7, %s5
  $region1: #{position_conv_forward.1} parent=0
    #allocation2 [shape = 'u8[20480]{0}', space=vmem, size = 0x5000, scoped, tag = 'input window, operand 1']
    #allocation3 [shape = 'u8[131072]{0}', space=vmem, size = 0x20000, scoped, tag = 'output window, operand 0']
    loop: start=0, step=1, limit=4
    $region2: #{position_conv_forward.1} parent=1 // loop_pre_header
      _
    $region3: #{position_conv_forward.1} parent=1 // loop_header
      %s10 = sphi 0, %s14
      %p11 = scmp.ge.s32.totalorder %s10, 4
      %s17 = sphi 0, %s29
      %s18 = sphi 0, %s25
      %s19 = sphi 0, %s17
      %s20 = sphi 0, %s18
      %s21 = sphi 0, %s19
      %s22 = sphi 0, %s20
      %s32 = sphi 0, %s34
      %s35 = sphi 0, %s32
      %s36 = sphi 0, %s35
      %s52 = sphi 0, %s36
      %s58 = sphi 0, %s60
      %s61 = sphi 0, %s58
      %s62 = sphi 0, %s61
      %s78 = sphi 0, %s62
      %s84 = sphi 0, %s86
      %s87 = sphi 0, %s84
      %s88 = sphi 0, %s87
      %s104 = sphi 0, %s88
      %s110 = sphi 0, %s112
      %s113 = sphi 0, %s110
      %s114 = sphi 0, %s113
      %s130 = sphi 0, %s114
      %s138 = sphi 0, %s140
      %s141 = sphi 0, %s138
      %s142 = sphi 0, %s141
      %s158 = sphi 0, %s142
    $region4: #{position_conv_forward.1} parent=1 // loop_header_branch
      %13 = sbr.rel (%p11) target = $region8
    $region5: #{position_conv_forward.1} parent=1 // loop_body
      %s15 = ssub.s32 %s10, 1
      %s16 = ssub.s32 %s10, 2
      %s23 = sadd.s32 1, %s18
      %p24 = scmp.ge.s32.totalorder %s23, 2
      %s25 = scalar_select %p24, 0, %s23
      %s26 = sadd.s32 1, %s17
      %s27 = scalar_select %p24, %s26, %s17
      %p28 = scmp.ge.s32.totalorder %s27, 1
      %s29 = scalar_select %p28, 0, %s27
      %s30 = ssub.s32 %s17, %s29
      %p31 = scmp.eq.s32.totalorder %s30, 0
      %s33 = sadd.s32 %s32, 1
      %s34 = scalar_select %p31, %s32, %s33
      %p37 = pneg %p31
      %p38 = scmp.eq.s32.totalorder %s10, 1
      %p39 = por %p37, %p38
      %p40 = scmp.ne.s32.totalorder %s32, %s35
      %p41 = scmp.eq.s32.totalorder %s10, 0
      %p42 = por %p40, %p41
      %p43 = scmp.ne.s32.totalorder %s32, %s35
      %p44 = scmp.eq.s32.totalorder %s15, 1
      %p45 = por %p43, %p44
      %p46 = scmp.ne.s32.totalorder %s35, %s36
      %p47 = scmp.eq.s32.totalorder %s15, 0
      %p48 = por %p46, %p47
      %p49 = scmp.ne.s32.totalorder %s35, %s36
      %p50 = scmp.eq.s32.totalorder %s16, 1
      %p51 = por %p49, %p50
      %p53 = scmp.ne.s32.totalorder %s36, %s52
      %p54 = scmp.eq.s32.totalorder %s16, 0
      %p55 = por %p53, %p54
      %s56 = ssub.s32 %s18, %s25
      %p57 = scmp.eq.s32.totalorder %s56, 0
      %s59 = sadd.s32 %s58, 1
      %s60 = scalar_select %p57, %s58, %s59
      %p63 = pneg %p57
      %p64 = scmp.eq.s32.totalorder %s10, 1
      %p65 = por %p63, %p64
      %p66 = scmp.ne.s32.totalorder %s58, %s61
      %p67 = scmp.eq.s32.totalorder %s10, 0
      %p68 = por %p66, %p67
      %p69 = scmp.ne.s32.totalorder %s58, %s61
      %p70 = scmp.eq.s32.totalorder %s15, 1
      %p71 = por %p69, %p70
      %p72 = scmp.ne.s32.totalorder %s61, %s62
      %p73 = scmp.eq.s32.totalorder %s15, 0
      %p74 = por %p72, %p73
      %p75 = scmp.ne.s32.totalorder %s61, %s62
      %p76 = scmp.eq.s32.totalorder %s16, 1
      %p77 = por %p75, %p76
      %p79 = scmp.ne.s32.totalorder %s62, %s78
      %p80 = scmp.eq.s32.totalorder %s16, 0
      %p81 = por %p79, %p80
      %s82 = ssub.s32 %s18, %s25
      %p83 = scmp.eq.s32.totalorder %s82, 0
      %s85 = sadd.s32 %s84, 1
      %s86 = scalar_select %p83, %s84, %s85
      %p89 = pneg %p83
      %p90 = scmp.eq.s32.totalorder %s10, 1
      %p91 = por %p89, %p90
      %p92 = scmp.ne.s32.totalorder %s84, %s87
      %p93 = scmp.eq.s32.totalorder %s10, 0
      %p94 = por %p92, %p93
      %p95 = scmp.ne.s32.totalorder %s84, %s87
      %p96 = scmp.eq.s32.totalorder %s15, 1
      %p97 = por %p95, %p96
      %p98 = scmp.ne.s32.totalorder %s87, %s88
      %p99 = scmp.eq.s32.totalorder %s15, 0
      %p100 = por %p98, %p99
      %p101 = scmp.ne.s32.totalorder %s87, %s88
      %p102 = scmp.eq.s32.totalorder %s16, 1
      %p103 = por %p101, %p102
      %p105 = scmp.ne.s32.totalorder %s88, %s104
      %p106 = scmp.eq.s32.totalorder %s16, 0
      %p107 = por %p105, %p106
      %s108 = ssub.s32 %s18, %s25
      %p109 = scmp.eq.s32.totalorder %s108, 0
      %s111 = sadd.s32 %s110, 1
      %s112 = scalar_select %p109, %s110, %s111
      %p115 = pneg %p109
      %p116 = scmp.eq.s32.totalorder %s10, 1
      %p117 = por %p115, %p116
      %p118 = scmp.ne.s32.totalorder %s110, %s113
      %p119 = scmp.eq.s32.totalorder %s10, 0
      %p120 = por %p118, %p119
      %p121 = scmp.ne.s32.totalorder %s110, %s113
      %p122 = scmp.eq.s32.totalorder %s15, 1
      %p123 = por %p121, %p122
      %p124 = scmp.ne.s32.totalorder %s113, %s114
      %p125 = scmp.eq.s32.totalorder %s15, 0
      %p126 = por %p124, %p125
      %p127 = scmp.ne.s32.totalorder %s113, %s114
      %p128 = scmp.eq.s32.totalorder %s16, 1
      %p129 = por %p127, %p128
      %p131 = scmp.ne.s32.totalorder %s114, %s130
      %p132 = scmp.eq.s32.totalorder %s16, 0
      %p133 = por %p131, %p132
      %s134 = ssub.s32 %s17, %s29
      %s135 = ssub.s32 %s18, %s25
      %s136 = sor.u32 %s134, %s135
      %p137 = scmp.eq.s32.totalorder %s136, 0
      %s139 = sadd.s32 %s138, 1
      %s140 = scalar_select %p137, %s138, %s139
      %p143 = pneg %p137
      %p144 = scmp.eq.s32.totalorder %s10, 1
      %p145 = por %p143, %p144
      %p146 = scmp.ne.s32.totalorder %s138, %s141
      %p147 = scmp.eq.s32.totalorder %s10, 0
      %p148 = por %p146, %p147
      %p149 = scmp.ne.s32.totalorder %s138, %s141
      %p150 = scmp.eq.s32.totalorder %s15, 1
      %p151 = por %p149, %p150
      %p152 = scmp.ne.s32.totalorder %s141, %s142
      %p153 = scmp.eq.s32.totalorder %s15, 0
      %p154 = por %p152, %p153
      %p155 = scmp.ne.s32.totalorder %s141, %s142
      %p156 = scmp.eq.s32.totalorder %s16, 1
      %p157 = por %p155, %p156
      %p159 = scmp.ne.s32.totalorder %s142, %s158
      %p160 = scmp.eq.s32.totalorder %s16, 0
      %p161 = por %p159, %p160
      %p162 = scmp.le.s32.totalorder 1, %s10
      %p163 = scmp.lt.s32.totalorder %s10, 3
      %p164 = pnand %p162, %p163
      %p165 = pneg %p164
      // Predicated region
      $region9: #{position_conv_forward.1} parent=5 // pred_check
        _
      $region10: #{position_conv_forward.1} parent=5 // pred_check_branch
        %167 = sbr.rel (%p164) target = $region12
      $region11: #{position_conv_forward.1} parent=5 // pred_region
        %s168 = ssub.s32 %s10, 1
        // Predicated region
        $region13: #{position_conv_forward.1} parent=11 // pred_check
          %p169 = pneg %p48
        $region14: #{position_conv_forward.1} parent=11 // pred_check_branch
          %171 = sbr.rel (%p169) target = $region16
        $region15: #{position_conv_forward.1} parent=11 // pred_region
          %s172 = smul.u32 16, %s19
          %p173 = scmp.lt.s32.totalorder %s172, 15
          %s174 = scalar_select %p173, %s172, 15
          %s175 = smul.addr %s174, 4
          %s176 = scalar_lea.vmem %s0, %s175
          %s177 = smul.u32 16, %s19
        $region16: #{position_conv_forward.1} parent=11 // pred_fallthru
          _
      $region12: #{position_conv_forward.1} parent=5 // pred_fallthru
        _
      %p178 = scmp.lt.s32.totalorder %s10, 2
      // Predicated region
      $region17: #{position_conv_forward.1} parent=5 // pred_check
        %p179 = pneg %p178
      $region18: #{position_conv_forward.1} parent=5 // pred_check_branch
        %181 = sbr.rel (%p179) target = $region20
      $region19: #{position_conv_forward.1} parent=5 // pred_region
        // Predicated region
        $region21: #{position_conv_forward.1} parent=19 // pred_check
          %p182 = pneg %p68
        $region22: #{position_conv_forward.1} parent=19 // pred_check_branch
          %184 = sbr.rel (%p182) target = $region24
        $region23: #{position_conv_forward.1} parent=19 // pred_region
          %s185 = sand.u32 %s58, 1
          %s186 = sand.u32 %s58, 1
          %s187 = smul.addr %s186, 20
          %s188 = scalar_lea.vmem [#allocation2], %s187
          %s189 = smul.addr %s18, 4
          %s190 = scalar_lea.vmem %s1, %s189
          // Predicated region
          $region25: #{position_conv_forward.1} parent=23 // pred_check
            _
          $region26: #{position_conv_forward.1} parent=23 // pred_check_branch
            %192 = sbr.rel (0) target = $region28
          $region27: #{position_conv_forward.1} parent=23 // pred_region
            // Predicated region
            $region29: #{position_conv_forward.1} parent=27 // pred_check
              _
            $region30: #{position_conv_forward.1} parent=27 // pred_check_branch
              %194 = sbr.rel target = $region32
            $region31: #{position_conv_forward.1} parent=27 // pred_region
              // Predicated region
              $region44: #{position_conv_forward.1} parent=31 // pred_check
                _
              $region45: #{position_conv_forward.1} parent=31 // pred_check_branch
                %218 = sbr.rel (0) target = $region47
              $region46: #{position_conv_forward.1} parent=31 // pred_region
                loop: start=0, step=1, limit=1
                $region48: #{position_conv_forward.1} parent=46 // loop_pre_header
                  _
                $region49: #{position_conv_forward.1} parent=46 // loop_header
                  %s220 = sphi 0, %s224
                  %p221 = scmp.ge.s32.totalorder %s220, 1
                  %s225 = sphi %s190, %s190
                  %s226 = sphi %s188, %s188
                $region50: #{position_conv_forward.1} parent=46 // loop_header_branch
                  %223 = sbr.rel (%p221) target = $region54
                $region51: #{position_conv_forward.1} parent=46 // loop_body
                  _
                $region52: #{position_conv_forward.1} parent=46 // loop_footer
                  %s224 = sadd.s32 1, %s220
                $region53: #{position_conv_forward.1} parent=46 // loop_footer_branch
                  %219 = sbr.rel target = $region49
                $region54: #{position_conv_forward.1} parent=46 // loop_exit
                  _
                %s228 = ssub.s32 16, 1
                loop: start=0, step=1, limit=1
                $region55: #{position_conv_forward.1} parent=46 // loop_pre_header
                  _
                $region56: #{position_conv_forward.1} parent=46 // loop_header
                  %s230 = sphi 0, %s234
                  %p231 = scmp.ge.s32.totalorder %s230, 1
                  %s235 = sphi %s190, %s190
                  %s236 = sphi %s188, %s188
                $region57: #{position_conv_forward.1} parent=46 // loop_header_branch
                  %233 = sbr.rel (%p231) target = $region61
                $region58: #{position_conv_forward.1} parent=46 // loop_body
                  %v237 = vld [vmem:[%s235] sm:%s228]
                  %238 = vst [vmem:[%s236] sm:%s228] %v237
                  %v239 = vld [vmem:[%s235 + $0x8] sm:%s228]
                  %240 = vst [vmem:[%s236 + $0x4] sm:%s228] %v239
                  %v241 = vld [vmem:[%s235 + $0x10] sm:%s228]
                  %242 = vst [vmem:[%s236 + $0x8] sm:%s228] %v241
                  %v243 = vld [vmem:[%s235 + $0x18] sm:%s228]
                  %244 = vst [vmem:[%s236 + $0xc] sm:%s228] %v243
                  %v245 = vld [vmem:[%s235 + $0x20] sm:%s228]
                  %246 = vst [vmem:[%s236 + $0x10] sm:%s228] %v245
                $region59: #{position_conv_forward.1} parent=46 // loop_footer
                  %s234 = sadd.s32 1, %s230
                $region60: #{position_conv_forward.1} parent=46 // loop_footer_branch
                  %229 = sbr.rel target = $region56
                $region61: #{position_conv_forward.1} parent=46 // loop_exit
                  _
              $region47: #{position_conv_forward.1} parent=31 // pred_fallthru
                _
            $region32: #{position_conv_forward.1} parent=27 // pred_fallthru
              _
            // Predicated region
            $region33: #{position_conv_forward.1} parent=27 // pred_check
              _
            $region34: #{position_conv_forward.1} parent=27 // pred_check_branch
              %196 = sbr.rel (0) target = $region36
            $region35: #{position_conv_forward.1} parent=27 // pred_region
              %s198 = ssub.s32 16, 1
              loop: start=0, step=1, limit=1
              $region37: #{position_conv_forward.1} parent=35 // loop_pre_header
                _
              $region38: #{position_conv_forward.1} parent=35 // loop_header
                %s200 = sphi 0, %s204
                %p201 = scmp.ge.s32.totalorder %s200, 1
                %s205 = sphi %s190, %s190
                %s206 = sphi %s188, %s188
              $region39: #{position_conv_forward.1} parent=35 // loop_header_branch
                %203 = sbr.rel (%p201) target = $region43
              $region40: #{position_conv_forward.1} parent=35 // loop_body
                %v207 = vld [vmem:[%s205] sm:%s198]
                %208 = vst [vmem:[%s206] sm:%s198] %v207
                %v209 = vld [vmem:[%s205 + $0x8] sm:%s198]
                %210 = vst [vmem:[%s206 + $0x4] sm:%s198] %v209
                %v211 = vld [vmem:[%s205 + $0x10] sm:%s198]
                %212 = vst [vmem:[%s206 + $0x8] sm:%s198] %v211
                %v213 = vld [vmem:[%s205 + $0x18] sm:%s198]
                %214 = vst [vmem:[%s206 + $0xc] sm:%s198] %v213
                %v215 = vld [vmem:[%s205 + $0x20] sm:%s198]
                %216 = vst [vmem:[%s206 + $0x10] sm:%s198] %v215
              $region41: #{position_conv_forward.1} parent=35 // loop_footer
                %s204 = sadd.s32 1, %s200
              $region42: #{position_conv_forward.1} parent=35 // loop_footer_branch
                %199 = sbr.rel target = $region38
              $region43: #{position_conv_forward.1} parent=35 // loop_exit
                _
            $region36: #{position_conv_forward.1} parent=27 // pred_fallthru
              _
          $region28: #{position_conv_forward.1} parent=23 // pred_fallthru
            _
          %247 = vnop
        $region24: #{position_conv_forward.1} parent=19 // pred_fallthru
          _
        // Predicated region
        $region62: #{position_conv_forward.1} parent=19 // pred_check
          %p248 = pneg %p94
        $region63: #{position_conv_forward.1} parent=19 // pred_check_branch
          %250 = sbr.rel (%p248) target = $region65
        $region64: #{position_conv_forward.1} parent=19 // pred_region
          %p251 = scmp.lt.s32.totalorder %s18, 1
          %s252 = scalar_select %p251, %s18, 1
          %s253 = scalar_lea.vmem %s2, %s252
        $region65: #{position_conv_forward.1} parent=19 // pred_fallthru
          _
        // Predicated region
        $region66: #{position_conv_forward.1} parent=19 // pred_check
          %p254 = pneg %p120
        $region67: #{position_conv_forward.1} parent=19 // pred_check_branch
          %256 = sbr.rel (%p254) target = $region69
        $region68: #{position_conv_forward.1} parent=19 // pred_region
          %p257 = scmp.lt.s32.totalorder %s18, 1
          %s258 = scalar_select %p257, %s18, 1
          %s259 = scalar_lea.vmem %s3, %s258
        $region69: #{position_conv_forward.1} parent=19 // pred_fallthru
          _
      $region20: #{position_conv_forward.1} parent=5 // pred_fallthru
        _
      %p260 = scmp.le.s32.totalorder 1, %s10
      %p261 = scmp.lt.s32.totalorder %s10, 3
      %p262 = pnand %p260, %p261
      %p263 = pneg %p262
      // Predicated region
      $region70: #{position_conv_forward.1} parent=5 // pred_check
        _
      $region71: #{position_conv_forward.1} parent=5 // pred_check_branch
        %265 = sbr.rel (%p262) target = $region73
      $region72: #{position_conv_forward.1} parent=5 // pred_region
        %s266 = ssub.s32 %s10, 1
        %s267 = sand.u32 %s61, 1
        %s268 = sand.u32 %s61, 1
        %s269 = smul.addr %s268, 20
        %s270 = scalar_lea.vmem [#allocation2], %s269
        // Predicated region
        $region74: #{position_conv_forward.1} parent=72 // pred_check
          %p271 = pneg %p74
        $region75: #{position_conv_forward.1} parent=72 // pred_check_branch
          %273 = sbr.rel (%p271) target = $region77
        $region76: #{position_conv_forward.1} parent=72 // pred_region
          _
        $region77: #{position_conv_forward.1} parent=72 // pred_fallthru
          _
        %s274 = smul.u32 16, %s19
        %p275 = scmp.lt.s32.totalorder %s274, 15
        %s276 = scalar_select %p275, %s274, 15
        %s277 = smul.addr %s276, 4
        %s278 = scalar_lea.vmem %s0, %s277
        %p279 = pneg %p48
        %p280 = pneg %p45
        %s281 = sand.u32 %s61, 1
        %s282 = sand.u32 %s61, 1
        %s283 = smul.addr %s282, 20
        %s284 = scalar_lea.vmem [#allocation2], %s283
        %p285 = pneg %p74
        %p286 = pneg %p71
        %p287 = scmp.lt.s32.totalorder %s20, 1
        %s288 = scalar_select %p287, %s20, 1
        %s289 = scalar_lea.vmem %s2, %s288
        %p290 = pneg %p100
        %p291 = pneg %p97
        %p292 = scmp.lt.s32.totalorder %s20, 1
        %s293 = scalar_select %p292, %s20, 1
        %s294 = scalar_lea.vmem %s3, %s293
        %p295 = pneg %p126
        %p296 = pneg %p123
        %p297 = pneg %p154
        %p298 = pneg %p151
        %s299 = sand.u32 %s141, 1
        %s300 = sand.u32 %s141, 1
        %s301 = smul.addr %s300, 128
        %s302 = scalar_lea.vmem [#allocation3], %s301
        %s303 = smul.u32 16, %s19
        %p304 = scmp.lt.s32.totalorder %s303, 15
        %s305 = scalar_select %p304, %s303, 15
        %s306 = smul.addr %s305, 4
        %s307 = scalar_lea.vmem %s0, %s306
        %s308 = smul.u32 16, %s19
        %p309 = scmp.lt.s32.totalorder %s20, 1
        %s310 = scalar_select %p309, %s20, 1
        %s311 = scalar_lea.vmem %s2, %s310
        %p312 = scmp.lt.s32.totalorder %s20, 1
        %s313 = scalar_select %p312, %s20, 1
        %s314 = scalar_lea.vmem %s3, %s313
        %s315 = smul.u32 16, %s19
        %v317 = vld [vmem:[%s307] sm:$0xf]
        %v318 = vld [vmem:[%s307 + $0x4] sm:$0xf]
        %v319 = vld [vmem:[%s307 + $0x8] sm:$0xf]
        %v320 = vld [vmem:[%s307 + $0xc] sm:$0xf]
        %v321 = vld [vmem:[%s307 + $0x10] sm:$0xf]
        %v322 = vld [vmem:[%s307 + $0x14] sm:$0xf]
        %v323 = vld [vmem:[%s307 + $0x18] sm:$0xf]
        %v324 = vld [vmem:[%s307 + $0x1c] sm:$0xf]
        %v325 = vld [vmem:[%s307 + $0x20] sm:$0xf]
        %v326 = vld [vmem:[%s307 + $0x24] sm:$0xf]
        %v327 = vld [vmem:[%s307 + $0x28] sm:$0xf]
        %v328 = vld [vmem:[%s307 + $0x2c] sm:$0xf]
        %v329 = vld [vmem:[%s307 + $0x30] sm:$0xf]
        %v330 = vld [vmem:[%s307 + $0x34] sm:$0xf]
        %v331 = vld [vmem:[%s307 + $0x38] sm:$0xf]
        %v332 = vld [vmem:[%s307 + $0x3c] sm:$0xf]
        %v333 = vld [vmem:[%s270] sm:$0xf]
        %v334 = vld [vmem:[%s270 + $0x4] sm:$0xf]
        %v335 = vld [vmem:[%s270 + $0x8] sm:$0xf]
        %v336 = vld [vmem:[%s270 + $0xc] sm:$0xf]
        %v337 = vld [vmem:[%s270 + $0x10] sm:$0x3]
        %v354 = vunpack.c.l.b16 %v317
        %v355 = vunpack.c.l.b16 %v318
        %v356 = vunpack.c.l.b16 %v319
        %v357 = vunpack.c.l.b16 %v320
        %v358 = vunpack.c.l.b16 %v321
        %v359 = vunpack.c.l.b16 %v322
        %v360 = vunpack.c.l.b16 %v323
        %v361 = vunpack.c.l.b16 %v324
        %v362 = vunpack.c.l.b16 %v325
        %v363 = vunpack.c.l.b16 %v326
        %v364 = vunpack.c.l.b16 %v327
        %v365 = vunpack.c.l.b16 %v328
        %v366 = vunpack.c.l.b16 %v329
        %v367 = vunpack.c.l.b16 %v330
        %v368 = vunpack.c.l.b16 %v331
        %v369 = vunpack.c.l.b16 %v332
        %v370 = vpack.c.b16 %v355, %v354
        %v371 = vpack.c.b16 %v357, %v356
        %v372 = vpack.c.b16 %v359, %v358
        %v373 = vpack.c.b16 %v361, %v360
        %v374 = vpack.c.b16 %v363, %v362
        %v375 = vpack.c.b16 %v365, %v364
        %v376 = vpack.c.b16 %v367, %v366
        %v377 = vpack.c.b16 %v369, %v368
        %v383 = vunpack.c.l.b16 %v333
        %v384 = vunpack.c.l.b16 %v334
        %v385 = vunpack.c.l.b16 %v335
        %v386 = vunpack.c.l.b16 %v336
        %v387 = vunpack.c.l.b16 %v337
        %v388 = vpack.c.b16 %v384, %v383
        %v389 = vpack.c.b16 %v386, %v385
        %v390 = vpack.c.b16 %v387, %v387
        %vm393 = vcmask 293888
        %v395 = vsel %vm393, %v370, 0
        %v398 = vsel %vm393, %v371, 0
        %v401 = vsel %vm393, %v372, 0
        %v404 = vsel %vm393, %v373, 0
        %v407 = vsel %vm393, %v374, 0
        %v410 = vsel %vm393, %v375, 0
        %v413 = vsel %vm393, %v376, 0
        %v416 = vsel %vm393, %v377, 0
        %vm418 = vcmask 1041408
        %v420 = vsel %vm418, %v390, 0
        %422 = vmatpush.bf16.msra.mxu0 0
        %423 = vmatpush.bf16.msra.mxu0 0
        %424 = vmatpush.bf16.msra.mxu0 0
        %425 = vmatpush.bf16.msra.mxu0 0
        %426 = vmatpush.bf16.msra.mxu0 0
        %427 = vmatpush.bf16.msra.mxu0 %v420
        %428 = vmatpush.bf16.msra.mxu0 %v389
        %429 = vmatpush.bf16.msra.mxu0 %v388
        %430 = vmatmul.bf16.gmra.mxu0 %v395
        %v431 = vpop.f32.mrf.mxu0
        %v432 = vadd.f32 0.0, %v431
        %v433 = vpop.f32.mrf.mxu0
        %v434 = vadd.f32 0.0, %v433
        %435 = vmatmul.bf16.gmra.mxu0 %v398
        %v436 = vpop.f32.mrf.mxu0
        %v437 = vadd.f32 0.0, %v436
        %v438 = vpop.f32.mrf.mxu0
        %v439 = vadd.f32 0.0, %v438
        %440 = vmatmul.bf16.gmra.mxu0 %v401
        %v441 = vpop.f32.mrf.mxu0
        %v442 = vadd.f32 0.0, %v441
        %v443 = vpop.f32.mrf.mxu0
        %v444 = vadd.f32 0.0, %v443
        %445 = vmatmul.bf16.gmra.mxu0 %v404
        %v446 = vpop.f32.mrf.mxu0
        %v447 = vadd.f32 0.0, %v446
        %v448 = vpop.f32.mrf.mxu0
        %v449 = vadd.f32 0.0, %v448
        %450 = vmatmul.bf16.gmra.mxu0 %v407
        %v451 = vpop.f32.mrf.mxu0
        %v452 = vadd.f32 0.0, %v451
        %v453 = vpop.f32.mrf.mxu0
        %v454 = vadd.f32 0.0, %v453
        %455 = vmatmul.bf16.gmra.mxu0 %v410
        %v456 = vpop.f32.mrf.mxu0
        %v457 = vadd.f32 0.0, %v456
        %v458 = vpop.f32.mrf.mxu0
        %v459 = vadd.f32 0.0, %v458
        %460 = vmatmul.bf16.gmra.mxu0 %v413
        %v461 = vpop.f32.mrf.mxu0
        %v462 = vadd.f32 0.0, %v461
        %v463 = vpop.f32.mrf.mxu0
        %v464 = vadd.f32 0.0, %v463
        %465 = vmatmul.bf16.gmra.mxu0 %v416
        %v466 = vpop.f32.mrf.mxu0
        %v467 = vadd.f32 0.0, %v466
        %v468 = vpop.f32.mrf.mxu0
        %v469 = vadd.f32 0.0, %v468
        %470 = vdwg.mxu0
        %v471 = vld [vmem:[%s311] sm:$0x1]
        %v473 = vperm.slane %v471, 0
        %v475 = vmul.f32 %v432, %v473
        %v476 = vmul.f32 %v434, %v473
        %v477 = vmul.f32 %v437, %v473
        %v478 = vmul.f32 %v439, %v473
        %v479 = vmul.f32 %v442, %v473
        %v480 = vmul.f32 %v444, %v473
        %v481 = vmul.f32 %v447, %v473
        %v482 = vmul.f32 %v449, %v473
        %v483 = vmul.f32 %v452, %v473
        %v484 = vmul.f32 %v454, %v473
        %v485 = vmul.f32 %v457, %v473
        %v486 = vmul.f32 %v459, %v473
        %v487 = vmul.f32 %v462, %v473
        %v488 = vmul.f32 %v464, %v473
        %v489 = vmul.f32 %v467, %v473
        %v490 = vmul.f32 %v469, %v473
        %v491 = vld [vmem:[%s314] sm:$0x1]
        %v493 = vperm.slane %v491, 0
        %v495 = vadd.f32 %v475, %v493
        %v496 = vadd.f32 %v476, %v493
        %v497 = vadd.f32 %v477, %v493
        %v498 = vadd.f32 %v478, %v493
        %v499 = vadd.f32 %v479, %v493
        %v500 = vadd.f32 %v480, %v493
        %v501 = vadd.f32 %v481, %v493
        %v502 = vadd.f32 %v482, %v493
        %v503 = vadd.f32 %v483, %v493
        %v504 = vadd.f32 %v484, %v493
        %v505 = vadd.f32 %v485, %v493
        %v506 = vadd.f32 %v486, %v493
        %v507 = vadd.f32 %v487, %v493
        %v508 = vadd.f32 %v488, %v493
        %v509 = vadd.f32 %v489, %v493
        %v510 = vadd.f32 %v490, %v493
        %v511 = vmax.f32 %v495, 0.0
        %v512 = vmax.f32 %v496, 0.0
        %v513 = vmax.f32 %v497, 0.0
        %v514 = vmax.f32 %v498, 0.0
        %v515 = vmax.f32 %v499, 0.0
        %v516 = vmax.f32 %v500, 0.0
        %v517 = vmax.f32 %v501, 0.0
        %v518 = vmax.f32 %v502, 0.0
        %v519 = vmax.f32 %v503, 0.0
        %v520 = vmax.f32 %v504, 0.0
        %v521 = vmax.f32 %v505, 0.0
        %v522 = vmax.f32 %v506, 0.0
        %v523 = vmax.f32 %v507, 0.0
        %v524 = vmax.f32 %v508, 0.0
        %v525 = vmax.f32 %v509, 0.0
        %v526 = vmax.f32 %v510, 0.0
        %527 = vst [vmem:[%s302] sm:$0xff] %v511
        %528 = vst [vmem:[%s302 + $0x8] sm:$0xff] %v512
        %529 = vst [vmem:[%s302 + $0x10] sm:$0xff] %v513
        %530 = vst [vmem:[%s302 + $0x18] sm:$0xff] %v514
        %531 = vst [vmem:[%s302 + $0x20] sm:$0xff] %v515
        %532 = vst [vmem:[%s302 + $0x28] sm:$0xff] %v516
        %533 = vst [vmem:[%s302 + $0x30] sm:$0xff] %v517
        %534 = vst [vmem:[%s302 + $0x38] sm:$0xff] %v518
        %535 = vst [vmem:[%s302 + $0x40] sm:$0xff] %v519
        %536 = vst [vmem:[%s302 + $0x48] sm:$0xff] %v520
        %537 = vst [vmem:[%s302 + $0x50] sm:$0xff] %v521
        %538 = vst [vmem:[%s302 + $0x58] sm:$0xff] %v522
        %539 = vst [vmem:[%s302 + $0x60] sm:$0xff] %v523
        %540 = vst [vmem:[%s302 + $0x68] sm:$0xff] %v524
        %541 = vst [vmem:[%s302 + $0x70] sm:$0xff] %v525
        %542 = vst [vmem:[%s302 + $0x78] sm:$0xff] %v526
        %s543 = sand.u32 %s141, 1
        %s544 = sand.u32 %s141, 1
        %s545 = smul.addr %s544, 128
        %s546 = scalar_lea.vmem [#allocation3], %s545
        // Predicated region
        $region78: #{position_conv_forward.1} parent=72 // pred_check
          %p547 = pneg %p151
        $region79: #{position_conv_forward.1} parent=72 // pred_check_branch
          %549 = sbr.rel (%p547) target = $region81
        $region80: #{position_conv_forward.1} parent=72 // pred_region
          %s550 = smul.u32 16, %s19
          %s551 = smul.addr %s550, 2
          %s552 = sadd.s32 %s20, %s551
          %s553 = smul.addr %s552, 8
          %s554 = scalar_lea.vmem %s4, %s553
          // Predicated region
          $region82: #{position_conv_forward.1} parent=80 // pred_check
            _
          $region83: #{position_conv_forward.1} parent=80 // pred_check_branch
            %556 = sbr.rel (0) target = $region85
          $region84: #{position_conv_forward.1} parent=80 // pred_region
            // Predicated region
            $region86: #{position_conv_forward.1} parent=84 // pred_check
              _
            $region87: #{position_conv_forward.1} parent=84 // pred_check_branch
              %558 = sbr.rel (0) target = $region89
            $region88: #{position_conv_forward.1} parent=84 // pred_region
              // Predicated region
              $region101: #{position_conv_forward.1} parent=88 // pred_check
                _
              $region102: #{position_conv_forward.1} parent=88 // pred_check_branch
                %604 = sbr.rel (0) target = $region104
              $region103: #{position_conv_forward.1} parent=88 // pred_region
                loop: start=0, step=1, limit=1
                $region105: #{position_conv_forward.1} parent=103 // loop_pre_header
                  _
                $region106: #{position_conv_forward.1} parent=103 // loop_header
                  %s606 = sphi 0, %s610
                  %p607 = scmp.ge.s32.totalorder %s606, 1
                  %s611 = sphi %s546, %s546
                  %s612 = sphi %s554, %s554
                $region107: #{position_conv_forward.1} parent=103 // loop_header_branch
                  %609 = sbr.rel (%p607) target = $region111
                $region108: #{position_conv_forward.1} parent=103 // loop_body
                  %v613 = vld [vmem:[%s611] sm:$0xff]
                  %614 = vst [vmem:[%s612] sm:$0xff] %v613
                  %v615 = vld [vmem:[%s611 + $0x8] sm:$0xff]
                  %616 = vst [vmem:[%s612 + $0x10] sm:$0xff] %v615
                  %v617 = vld [vmem:[%s611 + $0x10] sm:$0xff]
                  %618 = vst [vmem:[%s612 + $0x20] sm:$0xff] %v617
                  %v619 = vld [vmem:[%s611 + $0x18] sm:$0xff]
                  %620 = vst [vmem:[%s612 + $0x30] sm:$0xff] %v619
                  %v621 = vld [vmem:[%s611 + $0x20] sm:$0xff]
                  %622 = vst [vmem:[%s612 + $0x40] sm:$0xff] %v621
                  %v623 = vld [vmem:[%s611 + $0x28] sm:$0xff]
                  %624 = vst [vmem:[%s612 + $0x50] sm:$0xff] %v623
                  %v625 = vld [vmem:[%s611 + $0x30] sm:$0xff]
                  %626 = vst [vmem:[%s612 + $0x60] sm:$0xff] %v625
                  %v627 = vld [vmem:[%s611 + $0x38] sm:$0xff]
                  %628 = vst [vmem:[%s612 + $0x70] sm:$0xff] %v627
                  %v629 = vld [vmem:[%s611 + $0x40] sm:$0xff]
                  %630 = vst [vmem:[%s612 + $0x80] sm:$0xff] %v629
                  %v631 = vld [vmem:[%s611 + $0x48] sm:$0xff]
                  %632 = vst [vmem:[%s612 + $0x90] sm:$0xff] %v631
                  %v633 = vld [vmem:[%s611 + $0x50] sm:$0xff]
                  %634 = vst [vmem:[%s612 + $0xa0] sm:$0xff] %v633
                  %v635 = vld [vmem:[%s611 + $0x58] sm:$0xff]
                  %636 = vst [vmem:[%s612 + $0xb0] sm:$0xff] %v635
                  %v637 = vld [vmem:[%s611 + $0x60] sm:$0xff]
                  %638 = vst [vmem:[%s612 + $0xc0] sm:$0xff] %v637
                  %v639 = vld [vmem:[%s611 + $0x68] sm:$0xff]
                  %640 = vst [vmem:[%s612 + $0xd0] sm:$0xff] %v639
                  %v641 = vld [vmem:[%s611 + $0x70] sm:$0xff]
                  %642 = vst [vmem:[%s612 + $0xe0] sm:$0xff] %v641
                  %v643 = vld [vmem:[%s611 + $0x78] sm:$0xff]
                  %644 = vst [vmem:[%s612 + $0xf0] sm:$0xff] %v643
                $region109: #{position_conv_forward.1} parent=103 // loop_footer
                  %s610 = sadd.s32 1, %s606
                $region110: #{position_conv_forward.1} parent=103 // loop_footer_branch
                  %605 = sbr.rel target = $region106
                $region111: #{position_conv_forward.1} parent=103 // loop_exit
                  _
              $region104: #{position_conv_forward.1} parent=88 // pred_fallthru
                _
              // Predicated region
              $region112: #{position_conv_forward.1} parent=88 // pred_check
                _
              $region113: #{position_conv_forward.1} parent=88 // pred_check_branch
                %646 = sbr.rel target = $region115
              $region114: #{position_conv_forward.1} parent=88 // pred_region
                _
              $region115: #{position_conv_forward.1} parent=88 // pred_fallthru
                _
            $region89: #{position_conv_forward.1} parent=84 // pred_fallthru
              _
            // Predicated region
            $region90: #{position_conv_forward.1} parent=84 // pred_check
              _
            $region91: #{position_conv_forward.1} parent=84 // pred_check_branch
              %560 = sbr.rel target = $region93
            $region92: #{position_conv_forward.1} parent=84 // pred_region
              %s562 = ssub.s32 256, 1
              loop: start=0, step=1, limit=1
              $region94: #{position_conv_forward.1} parent=92 // loop_pre_header
                _
              $region95: #{position_conv_forward.1} parent=92 // loop_header
                %s564 = sphi 0, %s568
                %p565 = scmp.ge.s32.totalorder %s564, 1
                %s569 = sphi %s546, %s546
                %s570 = sphi %s554, %s554
              $region96: #{position_conv_forward.1} parent=92 // loop_header_branch
                %567 = sbr.rel (%p565) target = $region100
              $region97: #{position_conv_forward.1} parent=92 // loop_body
                %v571 = vld [vmem:[%s569] sm:%s562]
                %572 = vst [vmem:[%s570] sm:%s562] %v571
                %v573 = vld [vmem:[%s569 + $0x8] sm:%s562]
                %574 = vst [vmem:[%s570 + $0x10] sm:%s562] %v573
                %v575 = vld [vmem:[%s569 + $0x10] sm:%s562]
                %576 = vst [vmem:[%s570 + $0x20] sm:%s562] %v575
                %v577 = vld [vmem:[%s569 + $0x18] sm:%s562]
                %578 = vst [vmem:[%s570 + $0x30] sm:%s562] %v577
                %v579 = vld [vmem:[%s569 + $0x20] sm:%s562]
                %580 = vst [vmem:[%s570 + $0x40] sm:%s562] %v579
                %v581 = vld [vmem:[%s569 + $0x28] sm:%s562]
                %582 = vst [vmem:[%s570 + $0x50] sm:%s562] %v581
                %v583 = vld [vmem:[%s569 + $0x30] sm:%s562]
                %584 = vst [vmem:[%s570 + $0x60] sm:%s562] %v583
                %v585 = vld [vmem:[%s569 + $0x38] sm:%s562]
                %586 = vst [vmem:[%s570 + $0x70] sm:%s562] %v585
                %v587 = vld [vmem:[%s569 + $0x40] sm:%s562]
                %588 = vst [vmem:[%s570 + $0x80] sm:%s562] %v587
                %v589 = vld [vmem:[%s569 + $0x48] sm:%s562]
                %590 = vst [vmem:[%s570 + $0x90] sm:%s562] %v589
                %v591 = vld [vmem:[%s569 + $0x50] sm:%s562]
                %592 = vst [vmem:[%s570 + $0xa0] sm:%s562] %v591
                %v593 = vld [vmem:[%s569 + $0x58] sm:%s562]
                %594 = vst [vmem:[%s570 + $0xb0] sm:%s562] %v593
                %v595 = vld [vmem:[%s569 + $0x60] sm:%s562]
                %596 = vst [vmem:[%s570 + $0xc0] sm:%s562] %v595
                %v597 = vld [vmem:[%s569 + $0x68] sm:%s562]
                %598 = vst [vmem:[%s570 + $0xd0] sm:%s562] %v597
                %v599 = vld [vmem:[%s569 + $0x70] sm:%s562]
                %600 = vst [vmem:[%s570 + $0xe0] sm:%s562] %v599
                %v601 = vld [vmem:[%s569 + $0x78] sm:%s562]
                %602 = vst [vmem:[%s570 + $0xf0] sm:%s562] %v601
              $region98: #{position_conv_forward.1} parent=92 // loop_footer
                %s568 = sadd.s32 1, %s564
              $region99: #{position_conv_forward.1} parent=92 // loop_footer_branch
                %563 = sbr.rel target = $region95
              $region100: #{position_conv_forward.1} parent=92 // loop_exit
                _
            $region93: #{position_conv_forward.1} parent=84 // pred_fallthru
              _
          $region85: #{position_conv_forward.1} parent=80 // pred_fallthru
            _
          %647 = vnop
        $region81: #{position_conv_forward.1} parent=72 // pred_fallthru
          _
      $region73: #{position_conv_forward.1} parent=5 // pred_fallthru
        _
      %p648 = scmp.le.s32.totalorder 2, %s10
      // Predicated region
      $region116: #{position_conv_forward.1} parent=5 // pred_check
        %p649 = pneg %p648
      $region117: #{position_conv_forward.1} parent=5 // pred_check_branch
        %651 = sbr.rel (%p649) target = $region119
      $region118: #{position_conv_forward.1} parent=5 // pred_region
        %s652 = ssub.s32 %s10, 2
        // Predicated region
        $region120: #{position_conv_forward.1} parent=118 // pred_check
          %p653 = pneg %p157
        $region121: #{position_conv_forward.1} parent=118 // pred_check_branch
          %655 = sbr.rel (%p653) target = $region123
        $region122: #{position_conv_forward.1} parent=118 // pred_region
          %s656 = sand.u32 %s142, 1
          %s657 = sand.u32 %s142, 1
          %s658 = smul.addr %s657, 128
          %s659 = scalar_lea.vmem [#allocation3], %s658
        $region123: #{position_conv_forward.1} parent=118 // pred_fallthru
          _
      $region119: #{position_conv_forward.1} parent=5 // pred_fallthru
        _
    $region6: #{position_conv_forward.1} parent=1 // loop_footer
      %s14 = sadd.s32 1, %s10
    $region7: #{position_conv_forward.1} parent=1 // loop_footer_branch
      %9 = sbr.rel target = $region3
    $region8: #{position_conv_forward.1} parent=1 // loop_exit
      _

</llo_original>
